<compile_context>
chip_gen: v5e
topology: v5e:2x2
jax: 0.10.0
libtpu: 0.0.40
codegen_flags: <defaults>
</compile_context>

<pallas_src>
import jax
import jax.numpy as jnp
from jax.experimental import pallas as pl
from jax.experimental.pallas import tpu as pltpu


def _round_up(x, m):
    return ((x + m - 1) // m) * m


def _hidden_kernel(counts_ref, emb_ref, hid_ref):
    """Grid = (core_split=2 'parallel', V-chunk reduction 'arbitrary').

    counts_ref : [B, tv]   bf16   mask-weighted token-count chunk
    emb_ref    : [tv, Dp]  bf16   all M embedding tables packed along lanes
                                  (M*D zero-padded to Dp = round_up(M*D, 128))
    hid_ref    : [B, Dp]   f32    per-core partial accumulator (output block,
                                  resident across the reduction axis)
    """
    k = pl.program_id(1)

    @pl.when(k == 0)
    def _():
        hid_ref[...] = jnp.zeros_like(hid_ref)

    # [B, tv] @ [tv, Dp] -> f32 accumulate: every model's pooled hidden state.
    hid_ref[...] += jnp.dot(counts_ref[...], emb_ref[...],
                            preferred_element_type=jnp.float32)


def ensemble_forward(input_ids, attention_mask, labels,
                     emb_tables, cls_w, cls_b, vocab_size):
    """Ensemble forward.  Returns {'logits': [B, L], 'loss': None}."""
    del labels  # loss is None in the reference module
    B, S = input_ids.shape
    M, V, D = emb_tables.shape
    L = cls_w.shape[-1]
    assert V == vocab_size

    # --- wrapper glue (plain JAX, cheap) -----------------------------------
    # Mask-weighted mean pooling of an embedding lookup is linear in the
    # vocabulary axis:  pooled_m[b] = sum_v counts[b, v] * emb_m[v]
    # where counts[b, v] = sum_{s: ids[b,s]==v} mask[b,s] / sum_s mask[b,s].
    mask_f = attention_mask.astype(jnp.float32)                       # [B, S]
    denom = jnp.maximum(jnp.sum(mask_f, axis=1, keepdims=True), 1.0)  # [B, 1]
    weights = mask_f / denom                                          # [B, S]
    counts = jnp.zeros((B, V), jnp.float32).at[
        jnp.arange(B)[:, None], input_ids].add(weights)               # [B, V]
    # TODO(synk): for realistic shapes (B*S << V ~ 50k) replace the dense
    # counts @ full-table stream with a scalar-prefetched gather of only the
    # referenced rows (PrefetchScalarGridSpec + pl.Element / manual
    # make_async_copy) to cut HBM bytes by ~V/(B*S).

    # Lane-align the packed table width.
    Dp = _round_up(M * D, 128)

    # VMEM-budgeted V-chunk: 2x bf16 emb buffers + 2x bf16 counts buffers +
    # the two per-core f32 output blocks must fit a ~24 MiB budget (safe on
    # v7x 64 MiB physical / 32 MiB default scoped; we raise v5e/v6e scoped
    # limit explicitly below).
    budget = 24 * 1024 * 1024
    per_tv = 4 * Dp + 4 * B            # bytes per unit of tv (double-buffered)
    fixed = 2 * B * Dp * 4             # per-core output blocks
    tv = (budget - fixed) // per_tv
    tv = max(128, min(4096, (tv // 128) * 128))
    tv = min(tv, _round_up(V, 128))    # don't over-pad tiny vocabularies

    # Pad V so the two cores get an equal whole number of full chunks
    # (zero rows/cols contribute nothing to the accumulator).
    grid_v = pl.cdiv(V, tv)
    grid_v = grid_v + (grid_v % 2)
    gh = grid_v // 2                   # chunks per core
    v_pad = grid_v * tv

    counts_bf = jnp.pad(counts, ((0, 0), (0, v_pad - V))).astype(jnp.bfloat16)

    # Pack all M embedding tables along the lane dimension: [V, M*D] -> [v_pad, Dp].
    emb_cat = jnp.transpose(emb_tables, (1, 0, 2)).reshape(V, M * D)
    emb_bf = jnp.pad(emb_cat,
                     ((0, v_pad - V), (0, Dp - M * D))).astype(jnp.bfloat16)
    # TODO(synk): store emb_bf as int8 (+per-model scale) on v5e/v6e or fp8 on
    # v7x and widen to bf16 in-kernel to halve the dominant HBM stream.

    kernel = pl.pallas_call(
        _hidden_kernel,
        out_shape=jax.ShapeDtypeStruct((2, B, Dp), jnp.float32),
        grid_spec=pltpu.PrefetchScalarGridSpec(
            num_scalar_prefetch=0,
            grid=(2, gh),
            in_specs=[
                # counts chunk: core c, chunk k -> V-block c*gh + k
                pl.BlockSpec((B, tv), lambda c, k: (0, c * gh + k)),
                # packed table chunk
                pl.BlockSpec((tv, Dp), lambda c, k: (c * gh + k, 0)),
            ],
            # each core owns its own partial-output block -> no race
            out_specs=pl.BlockSpec((None, B, Dp), lambda c, k: (c, 0, 0)),
        ),
        compiler_params=pltpu.CompilerParams(
            dimension_semantics=("parallel", "arbitrary"),
            vmem_limit_bytes=32 * 1024 * 1024),
    )
    hid2 = kernel(counts_bf, emb_bf)            # [2, B, Dp] f32 partials
    hid = (hid2[0] + hid2[1])[:, :M * D]        # [B, M*D] (pad lanes are zero)

    # Tiny epilogue in plain JAX: heads stacked along K gives sum_m h_m @ W_m,
    # then a static 1/M and the mean bias reproduce the logits average.
    w_stack = cls_w.reshape(M * D, L).astype(jnp.float32)
    b_mean = jnp.mean(cls_b.astype(jnp.float32), axis=0)          # [L]
    logits_avg = hid @ w_stack * (1.0 / M) + b_mean
    return {'logits': logits_avg, 'loss': None}


if __name__ == "__main__":
    # small shapes implied by the forward: token ids + attention mask + labels
    B, S = 2, 8          # batch, sequence length
    V, D, L = 32, 32, 4  # vocab, hidden, num_labels
    M = 3                # number of ensemble members

    key = jax.random.PRNGKey(0)
    k_ids, k_emb, k_w, k_b = jax.random.split(key, 4)

    input_ids = jax.random.randint(k_ids, (B, S), 0, V, dtype=jnp.int32)
    attention_mask = jnp.array(
        [[1] * S, [1] * (S - 3) + [0] * 3], dtype=jnp.int32)  # ragged mask
    labels = jnp.zeros((B,), dtype=jnp.int32)  # unused (loss is None)

    # deterministic synthetic per-model parameters
    emb_tables = jax.random.normal(k_emb, (M, V, D), jnp.float32) * 0.02
    cls_w = jax.random.normal(k_w, (M, D, L), jnp.float32) * 0.02
    cls_b = jax.random.normal(k_b, (M, L), jnp.float32) * 0.02

    out = ensemble_forward(input_ids, attention_mask, labels,
                           emb_tables, cls_w, cls_b, V)
    jax.block_until_ready(out['logits'])

    # --- reference 1: pure-f32 per-model forward + mean (module semantics)
    onehot = jax.nn.one_hot(input_ids, V, dtype=jnp.float32)      # [B,S,V]
    mask_f = attention_mask.astype(jnp.float32)
    denom = jnp.maximum(mask_f.sum(1, keepdims=True), 1.0)
    ref_list = []
    for m in range(M):
        h = jnp.einsum('bsv,vd->bsd', onehot, emb_tables[m])
        pooled = jnp.einsum('bs,bsd->bd', mask_f, h) / denom
        ref_list.append(pooled @ cls_w[m] + cls_b[m])
    ref_f32 = jnp.mean(jnp.stack(ref_list), axis=0)

    # --- reference 2: same algebra with bf16-quantized matmul operands
    #     (matches the kernel's bf16 MXU inputs / f32 accumulation)
    weights = mask_f / denom
    counts = jnp.zeros((B, V), jnp.float32).at[
        jnp.arange(B)[:, None], input_ids].add(weights)
    counts_q = counts.astype(jnp.bfloat16).astype(jnp.float32)
    emb_q = emb_tables.astype(jnp.bfloat16).astype(jnp.float32)
    hid_q = jnp.einsum('bv,mvd->bmd', counts_q, emb_q)
    logits_q = jnp.einsum('bmd,mdl->bml', hid_q, cls_w)
    ref_bf16 = jnp.mean(logits_q, axis=1) + jnp.mean(cls_b, axis=0)

    assert out['loss'] is None
    assert jnp.allclose(out['logits'], ref_bf16, atol=1e-5, rtol=1e-5)
    assert jnp.allclose(out['logits'], ref_f32, atol=1e-3, rtol=5e-2)

    print("KERNEL_OK")
</pallas_src>

<mosaic_0001>
module attributes {stable_mosaic.version = 11 : i64} {
  func.func @_hidden_kernel(%arg0: i32, %arg1: i32, %arg2: memref<2x128xbf16, #tpu.memory_space<vmem>>, %arg3: memref<128x128xbf16, #tpu.memory_space<vmem>>, %arg4: memref<1x2x128xf32, #tpu.memory_space<vmem>>) attributes {dimension_semantics = [#tpu.dimension_semantics<parallel>, #tpu.dimension_semantics<arbitrary>], iteration_bounds = array<i64: 2, 1>, scalar_prefetch = 0 : i64, scratch_operands = 0 : i64, tpu.core_type = #tpu.core_type<tc>, window_params = [{transform_indices = @transform_0, window_bounds = array<i64: 2, 128>}, {transform_indices = @transform_1, window_bounds = array<i64: 128, 128>}, {transform_indices = @transform_2, window_bounds = array<i64: 1, 2, 128>}]} {
    %c0_i32 = arith.constant 0 : i32
    %0 = arith.cmpi eq, %arg1, %c0_i32 : i32
    %1 = arith.extui %0 : i1 to i32
    %c0_i32_0 = arith.constant 0 : i32
    %2 = arith.cmpi ne, %1, %c0_i32_0 : i32
    scf.if %2 {
      %cst_10 = arith.constant 0.000000e+00 : f32
      %12 = vector.broadcast %cst_10 : f32 to vector<2x128xf32>
      %c0_11 = arith.constant 0 : index
      %c0_12 = arith.constant 0 : index
      %c0_13 = arith.constant 0 : index
      %13 = vector.load %arg4[%c0_11, %c0_12, %c0_13] : memref<1x2x128xf32, #tpu.memory_space<vmem>>, vector<1x2x128xf32>
      %14 = vector.shape_cast %13 : vector<1x2x128xf32> to vector<2x128xf32>
      %15 = vector.shape_cast %12 : vector<2x128xf32> to vector<1x2x128xf32>
      tpu.vector_store %arg4[%c0_11, %c0_12, %c0_13], %15 {strides = array<i32>} : memref<1x2x128xf32, #tpu.memory_space<vmem>>, vector<1x2x128xf32>,
    } else {
    }
    %c0 = arith.constant 0 : index
    %c0_1 = arith.constant 0 : index
    %c0_2 = arith.constant 0 : index
    %3 = vector.load %arg4[%c0, %c0_1, %c0_2] : memref<1x2x128xf32, #tpu.memory_space<vmem>>, vector<1x2x128xf32>
    %4 = vector.shape_cast %3 : vector<1x2x128xf32> to vector<2x128xf32>
    %c0_3 = arith.constant 0 : index
    %c0_4 = arith.constant 0 : index
    %5 = vector.load %arg2[%c0_3, %c0_4] : memref<2x128xbf16, #tpu.memory_space<vmem>>, vector<2x128xbf16>
    %c0_5 = arith.constant 0 : index
    %c0_6 = arith.constant 0 : index
    %6 = vector.load %arg3[%c0_5, %c0_6] : memref<128x128xbf16, #tpu.memory_space<vmem>>, vector<128x128xbf16>
    %cst = arith.constant dense<0.000000e+00> : vector<2x128xf32>
    %7 = tpu.matmul %5, %6, %cst {dimension_numbers = #tpu.dot_dimension_numbers<[1], [0], [0], [1], [0, 0, 1, 1], [], []>} : vector<2x128xbf16>, vector<128x128xbf16>, vector<2x128xf32> -> vector<2x128xf32>
    %8 = arith.addf %4, %7 : vector<2x128xf32>
    %c0_7 = arith.constant 0 : index
    %c0_8 = arith.constant 0 : index
    %c0_9 = arith.constant 0 : index
    %9 = vector.load %arg4[%c0_7, %c0_8, %c0_9] : memref<1x2x128xf32, #tpu.memory_space<vmem>>, vector<1x2x128xf32>
    %10 = vector.shape_cast %9 : vector<1x2x128xf32> to vector<2x128xf32>
    %11 = vector.shape_cast %8 : vector<2x128xf32> to vector<1x2x128xf32>
    tpu.vector_store %arg4[%c0_7, %c0_8, %c0_9], %11 {strides = array<i32>} : memref<1x2x128xf32, #tpu.memory_space<vmem>>, vector<1x2x128xf32>,
    return
  }
  func.func @transform_0(%arg0: i32, %arg1: i32) -> (i32, i32) {
    %c1_i32 = arith.constant 1 : i32
    %0 = arith.muli %arg0, %c1_i32 : i32
    %1 = arith.addi %0, %arg1 : i32
    %c0_i32 = arith.constant 0 : i32
    %c0_i32_0 = arith.constant 0 : i32
    return %c0_i32, %1 : i32, i32
  }
  func.func @transform_1(%arg0: i32, %arg1: i32) -> (i32, i32) {
    %c1_i32 = arith.constant 1 : i32
    %0 = arith.muli %arg0, %c1_i32 : i32
    %1 = arith.addi %0, %arg1 : i32
    %c0_i32 = arith.constant 0 : i32
    %c0_i32_0 = arith.constant 0 : i32
    return %1, %c0_i32 : i32, i32
  }
  func.func @transform_2(%arg0: i32, %arg1: i32) -> (i32, i32, i32) {
    %c0_i32 = arith.constant 0 : i32
    %c0_i32_0 = arith.constant 0 : i32
    %c0_i32_1 = arith.constant 0 : i32
    return %arg0, %c0_i32, %c0_i32_0 : i32, i32, i32
  }
}

</mosaic_0001>

<llo_original>
// kernel: tpu_custom_call.1
$region0: #{tpu_custom_call.1}
  #allocation0 [shape = 'u32[]', space=smem, size = 0x4, offset = 0x4, fixed_abs, tag = 'smem constant byte address 0x4 - core index']
  #allocation1 [shape = 'u32[72,128]{1,0:T(1,128)}', space=vmem, size = 0x9000, scoped, tag = 'internal scratch']
  %s0 = inlined_call_operand.hbm [shape: bf16[2,256], index: 0, kind: input, shape index: {}]
  %s1 = inlined_call_operand.hbm [shape: bf16[256,128], index: 1, kind: input, shape index: {}]
  %s2 = inlined_call_operand.hbm [shape: f32[2,2,128], index: 2, kind: output, shape index: {}]
  %s3 = sld [smem:[#allocation0]]
  $region53: #{tpu_custom_call.1} parent=0
    _
  %s5 = ssub.s32 1, %s3
  %s6 = scalar_select 0, %s5, %s3
  $region1: #{tpu_custom_call.1} parent=0
    #allocation2 [shape = 'u8[1024]{0}', space=vmem, size = 0x400, scoped, tag = 'input window, operand 0']
    #allocation3 [shape = 's32[2]{0}', space=sflag, size = 0x8, scoped, tag = 'scoped memory for tpu_custom_call.1']
    #allocation4 [shape = 's32[2]{0}', space=sflag, size = 0x8, scoped, tag = 'scoped memory for tpu_custom_call.1']
    #allocation5 [shape = 'u8[65536]{0}', space=vmem, size = 0x10000, scoped, tag = 'input window, operand 1']
    #allocation6 [shape = 's32[2]{0}', space=sflag, size = 0x8, scoped, tag = 'scoped memory for tpu_custom_call.1']
    #allocation7 [shape = 'u8[2048]{0}', space=vmem, size = 0x800, scoped, tag = 'output window, operand 0']
    %7 = vsyncpa [#allocation3], 0
    %s8 = scalar_lea.sflag [#allocation3], 1
    %9 = vsyncpa %s8, 0
    %10 = vsyncpa [#allocation6], 0
    %s11 = scalar_lea.sflag [#allocation6], 1
    %12 = vsyncpa %s11, 0
    %13 = vsyncpa [#allocation4], 0
    %s14 = scalar_lea.sflag [#allocation4], 1
    %15 = vsyncpa %s14, 0
    loop: start=0, step=1, limit=4
    $region2: #{tpu_custom_call.1} parent=1 // loop_pre_header
      _
    $region3: #{tpu_custom_call.1} parent=1 // loop_header
      %s17 = sphi 0, %s21
      %p18 = scmp.ge.s32.totalorder %s17, 4
      %s24 = sphi 0, %s36
      %s25 = sphi 0, %s32
      %s26 = sphi 0, %s24
      %s27 = sphi 0, %s25
      %s28 = sphi 0, %s26
      %s29 = sphi 0, %s27
      %s41 = sphi 0, %s43
      %s44 = sphi 0, %s41
      %s45 = sphi 0, %s44
      %s61 = sphi 0, %s45
      %s69 = sphi 0, %s71
      %s72 = sphi 0, %s69
      %s73 = sphi 0, %s72
      %s89 = sphi 0, %s73
      %s95 = sphi 0, %s97
      %s98 = sphi 0, %s95
      %s99 = sphi 0, %s98
      %s115 = sphi 0, %s99
    $region4: #{tpu_custom_call.1} parent=1 // loop_header_branch
      %20 = sbr.rel (%p18) target = $region8
    $region5: #{tpu_custom_call.1} parent=1 // loop_body
      %s22 = ssub.s32 %s17, 1
      %s23 = ssub.s32 %s17, 2
      %s30 = sadd.s32 1, %s25
      %p31 = scmp.ge.s32.totalorder %s30, 1
      %s32 = scalar_select %p31, 0, %s30
      %s33 = sadd.s32 1, %s24
      %s34 = scalar_select %p31, %s33, %s24
      %p35 = scmp.ge.s32.totalorder %s34, 2
      %s36 = scalar_select %p35, 0, %s34
      %s37 = sadd.s32 %s24, %s25
      %s38 = sadd.s32 %s36, %s32
      %s39 = ssub.s32 %s37, %s38
      %p40 = scmp.eq.s32.totalorder %s39, 0
      %s42 = sadd.s32 %s41, 1
      %s43 = scalar_select %p40, %s41, %s42
      %p46 = pneg %p40
      %p47 = scmp.eq.s32.totalorder %s17, 1
      %p48 = por %p46, %p47
      %p49 = scmp.ne.s32.totalorder %s41, %s44
      %p50 = scmp.eq.s32.totalorder %s17, 0
      %p51 = por %p49, %p50
      %p52 = scmp.ne.s32.totalorder %s41, %s44
      %p53 = scmp.eq.s32.totalorder %s22, 1
      %p54 = por %p52, %p53
      %p55 = scmp.ne.s32.totalorder %s44, %s45
      %p56 = scmp.eq.s32.totalorder %s22, 0
      %p57 = por %p55, %p56
      %p58 = scmp.ne.s32.totalorder %s44, %s45
      %p59 = scmp.eq.s32.totalorder %s23, 1
      %p60 = por %p58, %p59
      %p62 = scmp.ne.s32.totalorder %s45, %s61
      %p63 = scmp.eq.s32.totalorder %s23, 0
      %p64 = por %p62, %p63
      %s65 = sadd.s32 %s24, %s25
      %s66 = sadd.s32 %s36, %s32
      %s67 = ssub.s32 %s65, %s66
      %p68 = scmp.eq.s32.totalorder %s67, 0
      %s70 = sadd.s32 %s69, 1
      %s71 = scalar_select %p68, %s69, %s70
      %p74 = pneg %p68
      %p75 = scmp.eq.s32.totalorder %s17, 1
      %p76 = por %p74, %p75
      %p77 = scmp.ne.s32.totalorder %s69, %s72
      %p78 = scmp.eq.s32.totalorder %s17, 0
      %p79 = por %p77, %p78
      %p80 = scmp.ne.s32.totalorder %s69, %s72
      %p81 = scmp.eq.s32.totalorder %s22, 1
      %p82 = por %p80, %p81
      %p83 = scmp.ne.s32.totalorder %s72, %s73
      %p84 = scmp.eq.s32.totalorder %s22, 0
      %p85 = por %p83, %p84
      %p86 = scmp.ne.s32.totalorder %s72, %s73
      %p87 = scmp.eq.s32.totalorder %s23, 1
      %p88 = por %p86, %p87
      %p90 = scmp.ne.s32.totalorder %s73, %s89
      %p91 = scmp.eq.s32.totalorder %s23, 0
      %p92 = por %p90, %p91
      %s93 = ssub.s32 %s24, %s36
      %p94 = scmp.eq.s32.totalorder %s93, 0
      %s96 = sadd.s32 %s95, 1
      %s97 = scalar_select %p94, %s95, %s96
      %p100 = pneg %p94
      %p101 = scmp.eq.s32.totalorder %s17, 1
      %p102 = por %p100, %p101
      %p103 = scmp.ne.s32.totalorder %s95, %s98
      %p104 = scmp.eq.s32.totalorder %s17, 0
      %p105 = por %p103, %p104
      %p106 = scmp.ne.s32.totalorder %s95, %s98
      %p107 = scmp.eq.s32.totalorder %s22, 1
      %p108 = por %p106, %p107
      %p109 = scmp.ne.s32.totalorder %s98, %s99
      %p110 = scmp.eq.s32.totalorder %s22, 0
      %p111 = por %p109, %p110
      %p112 = scmp.ne.s32.totalorder %s98, %s99
      %p113 = scmp.eq.s32.totalorder %s23, 1
      %p114 = por %p112, %p113
      %p116 = scmp.ne.s32.totalorder %s99, %s115
      %p117 = scmp.eq.s32.totalorder %s23, 0
      %p118 = por %p116, %p117
      %p119 = scmp.le.s32.totalorder 1, %s17
      %p120 = scmp.lt.s32.totalorder %s17, 3
      %p121 = pnand %p119, %p120
      %p122 = pneg %p121
      // Predicated region
      $region9: #{tpu_custom_call.1} parent=5 // pred_check
        _
      $region10: #{tpu_custom_call.1} parent=5 // pred_check_branch
        %124 = sbr.rel (%p121) target = $region12
      $region11: #{tpu_custom_call.1} parent=5 // pred_region
        %s125 = ssub.s32 %s17, 1
      $region12: #{tpu_custom_call.1} parent=5 // pred_fallthru
        _
      %p126 = scmp.lt.s32.totalorder %s17, 2
      // Predicated region
      $region13: #{tpu_custom_call.1} parent=5 // pred_check
        %p127 = pneg %p126
      $region14: #{tpu_custom_call.1} parent=5 // pred_check_branch
        %129 = sbr.rel (%p127) target = $region16
      $region15: #{tpu_custom_call.1} parent=5 // pred_region
        // Predicated region
        $region17: #{tpu_custom_call.1} parent=15 // pred_check
          %p130 = pneg %p51
        $region18: #{tpu_custom_call.1} parent=15 // pred_check_branch
          %132 = sbr.rel (%p130) target = $region20
        $region19: #{tpu_custom_call.1} parent=15 // pred_region
          %s133 = sand.u32 %s41, 1
          %s134 = scalar_lea.sflag [#allocation3], %s133
          %s135 = sand.u32 %s41, 1
          %s136 = scalar_lea.vmem [#allocation2], %s135
          %s137 = sadd.s32 %s24, %s25
          %139 = vsyncadd %s134, 0
          %s140 = scalar_lea.hbm %s0, %s137
          %s142 = sshll.u32 %s140, 4
          %s143 = int_to_ptr.hbm [resolvable:$true] %s142
          %s144 = sshll.u32 %s136, 4
          %s145 = int_to_ptr.vmem [resolvable:$true] %s144
          %147 = dma.hbm_to_vmem [thread:$0]  %s143, 16, %s145, %s134
        $region20: #{tpu_custom_call.1} parent=15 // pred_fallthru
          _
        // Predicated region
        $region21: #{tpu_custom_call.1} parent=15 // pred_check
          %p148 = pneg %p79
        $region22: #{tpu_custom_call.1} parent=15 // pred_check_branch
          %150 = sbr.rel (%p148) target = $region24
        $region23: #{tpu_custom_call.1} parent=15 // pred_region
          %s151 = sand.u32 %s69, 1
          %s152 = scalar_lea.sflag [#allocation6], %s151
          %s153 = sand.u32 %s69, 1
          %s154 = smul.addr %s153, 64
          %s155 = scalar_lea.vmem [#allocation5], %s154
          %s156 = sadd.s32 %s24, %s25
          %s157 = smul.u32 16, %s156
          %159 = vsyncadd %s152, 0
          %s160 = smul.addr %s157, 4
          %s161 = scalar_lea.hbm %s1, %s160
          %s162 = sshll.u32 %s161, 4
          %s163 = int_to_ptr.hbm [resolvable:$true] %s162
          %s164 = sshll.u32 %s155, 4
          %s165 = int_to_ptr.vmem [resolvable:$true] %s164
          %170 = dma.hbm_to_vmem [thread:$0]  %s163, 1024, %s165, %s152, 64, 64, 4
        $region24: #{tpu_custom_call.1} parent=15 // pred_fallthru
          _
      $region16: #{tpu_custom_call.1} parent=5 // pred_fallthru
        _
      %p171 = scmp.le.s32.totalorder 1, %s17
      %p172 = scmp.lt.s32.totalorder %s17, 3
      %p173 = pnand %p171, %p172
      %p174 = pneg %p173
      // Predicated region
      $region25: #{tpu_custom_call.1} parent=5 // pred_check
        _
      $region26: #{tpu_custom_call.1} parent=5 // pred_check_branch
        %176 = sbr.rel (%p173) target = $region28
      $region27: #{tpu_custom_call.1} parent=5 // pred_region
        %s177 = ssub.s32 %s17, 1
        %s178 = sand.u32 %s44, 1
        %s179 = scalar_lea.sflag [#allocation3], %s178
        %s180 = sand.u32 %s44, 1
        %s181 = scalar_lea.vmem [#allocation2], %s180
        // Predicated region
        $region29: #{tpu_custom_call.1} parent=27 // pred_check
          %p182 = pneg %p57
        $region30: #{tpu_custom_call.1} parent=27 // pred_check_branch
          %184 = sbr.rel (%p182) target = $region32
        $region31: #{tpu_custom_call.1} parent=27 // pred_region
          %186 = dma.done %s179, 16
        $region32: #{tpu_custom_call.1} parent=27 // pred_fallthru
          _
        %s187 = sand.u32 %s72, 1
        %s188 = scalar_lea.sflag [#allocation6], %s187
        %s189 = sand.u32 %s72, 1
        %s190 = smul.addr %s189, 64
        %s191 = scalar_lea.vmem [#allocation5], %s190
        // Predicated region
        $region33: #{tpu_custom_call.1} parent=27 // pred_check
          %p192 = pneg %p85
        $region34: #{tpu_custom_call.1} parent=27 // pred_check_branch
          %194 = sbr.rel (%p192) target = $region36
        $region35: #{tpu_custom_call.1} parent=27 // pred_region
          %196 = dma.done %s188, 1024
        $region36: #{tpu_custom_call.1} parent=27 // pred_fallthru
          _
        %s197 = sand.u32 %s44, 1
        %s198 = scalar_lea.sflag [#allocation3], %s197
        %s199 = sand.u32 %s44, 1
        %s200 = scalar_lea.vmem [#allocation2], %s199
        %p201 = pneg %p57
        %p202 = pneg %p54
        %s203 = sand.u32 %s72, 1
        %s204 = scalar_lea.sflag [#allocation6], %s203
        %s205 = sand.u32 %s72, 1
        %s206 = smul.addr %s205, 64
        %s207 = scalar_lea.vmem [#allocation5], %s206
        %p208 = pneg %p85
        %p209 = pneg %p82
        %p210 = pneg %p111
        %p211 = pneg %p108
        %s212 = sand.u32 %s98, 1
        %s213 = scalar_lea.sflag [#allocation4], %s212
        %s214 = sand.u32 %s98, 1
        %s215 = smul.addr %s214, 2
        %s216 = scalar_lea.vmem [#allocation7], %s215
        %s217 = sadd.s32 %s26, %s27
        %s218 = sadd.s32 %s26, %s27
        %s219 = smul.u32 16, %s218
        %p220 = scmp.eq.s32.totalorder %s27, 0
        // Predicated region
        $region37: #{tpu_custom_call.1} parent=27 // pred_check
          %p221 = pneg %p220
        $region38: #{tpu_custom_call.1} parent=27 // pred_check_branch
          %223 = sbr.rel (%p221) target = $region40
        $region39: #{tpu_custom_call.1} parent=27 // pred_region
          %224 = vst [vmem:[%s216] sm:$0x3] 0.0
        $region40: #{tpu_custom_call.1} parent=27 // pred_fallthru
          _
        %v225 = vld [vmem:[%s216] sm:$0x3]
        %v226 = vld [vmem:[%s181] sm:$0x1]
        %v227 = vld [vmem:[%s191] sm:$0xf]
        %v228 = vld [vmem:[%s191 + $0x4] sm:$0xf]
        %v229 = vld [vmem:[%s191 + $0x8] sm:$0xf]
        %v230 = vld [vmem:[%s191 + $0xc] sm:$0xf]
        %v231 = vld [vmem:[%s191 + $0x10] sm:$0xf]
        %v232 = vld [vmem:[%s191 + $0x14] sm:$0xf]
        %v233 = vld [vmem:[%s191 + $0x18] sm:$0xf]
        %v234 = vld [vmem:[%s191 + $0x1c] sm:$0xf]
        %v235 = vld [vmem:[%s191 + $0x20] sm:$0xf]
        %v236 = vld [vmem:[%s191 + $0x24] sm:$0xf]
        %v237 = vld [vmem:[%s191 + $0x28] sm:$0xf]
        %v238 = vld [vmem:[%s191 + $0x2c] sm:$0xf]
        %v239 = vld [vmem:[%s191 + $0x30] sm:$0xf]
        %v240 = vld [vmem:[%s191 + $0x34] sm:$0xf]
        %v241 = vld [vmem:[%s191 + $0x38] sm:$0xf]
        %v242 = vld [vmem:[%s191 + $0x3c] sm:$0xf]
        %v259 = vunpack.c.l.b16 %v227
        %v260 = vunpack.c.l.b16 %v228
        %v261 = vunpack.c.l.b16 %v229
        %v262 = vunpack.c.l.b16 %v230
        %v263 = vunpack.c.l.b16 %v231
        %v264 = vunpack.c.l.b16 %v232
        %v265 = vunpack.c.l.b16 %v233
        %v266 = vunpack.c.l.b16 %v234
        %v267 = vunpack.c.l.b16 %v235
        %v268 = vunpack.c.l.b16 %v236
        %v269 = vunpack.c.l.b16 %v237
        %v270 = vunpack.c.l.b16 %v238
        %v271 = vunpack.c.l.b16 %v239
        %v272 = vunpack.c.l.b16 %v240
        %v273 = vunpack.c.l.b16 %v241
        %v274 = vunpack.c.l.b16 %v242
        %v275 = vpack.c.b16 %v260, %v259
        %v276 = vpack.c.b16 %v262, %v261
        %v277 = vpack.c.b16 %v264, %v263
        %v278 = vpack.c.b16 %v266, %v265
        %v279 = vpack.c.b16 %v268, %v267
        %v280 = vpack.c.b16 %v270, %v269
        %v281 = vpack.c.b16 %v272, %v271
        %v282 = vpack.c.b16 %v274, %v273
        %291 = vmatpush.bf16.msra.mxu0 %v282
        %292 = vmatpush.bf16.msra.mxu0 %v281
        %293 = vmatpush.bf16.msra.mxu0 %v280
        %294 = vmatpush.bf16.msra.mxu0 %v279
        %295 = vmatpush.bf16.msra.mxu0 %v278
        %296 = vmatpush.bf16.msra.mxu0 %v277
        %297 = vmatpush.bf16.msra.mxu0 %v276
        %298 = vmatpush.bf16.msra.mxu0 %v275
        %299 = vmatmul.bf16.gmra.mxu0 %v226
        %v300 = vpop.f32.mrf.mxu0
        %v301 = vadd.f32 0.0, %v300
        %v302 = vpop.f32.mrf.mxu0
        %303 = vdwg.mxu0
        %v304 = vadd.f32 %v225, %v301
        %305 = vst [vmem:[%s216] sm:$0x3] %v304
        %s306 = sand.u32 %s98, 1
        %s307 = scalar_lea.sflag [#allocation4], %s306
        %s308 = sand.u32 %s98, 1
        %s309 = smul.addr %s308, 2
        %s310 = scalar_lea.vmem [#allocation7], %s309
        // Predicated region
        $region41: #{tpu_custom_call.1} parent=27 // pred_check
          %p311 = pneg %p108
        $region42: #{tpu_custom_call.1} parent=27 // pred_check_branch
          %313 = sbr.rel (%p311) target = $region44
        $region43: #{tpu_custom_call.1} parent=27 // pred_region
          %315 = vsyncadd %s307, 0
          %s316 = smul.addr %s26, 2
          %s317 = scalar_lea.hbm %s2, %s316
          %s319 = sshll.u32 %s310, 4
          %s320 = int_to_ptr.vmem [resolvable:$true] %s319
          %s321 = sshll.u32 %s317, 4
          %s322 = int_to_ptr.hbm [resolvable:$true] %s321
          %324 = dma.vmem_to_hbm [thread:$0]  %s320, 32, %s322, %s307
        $region44: #{tpu_custom_call.1} parent=27 // pred_fallthru
          _
      $region28: #{tpu_custom_call.1} parent=5 // pred_fallthru
        _
      %p325 = scmp.le.s32.totalorder 2, %s17
      // Predicated region
      $region45: #{tpu_custom_call.1} parent=5 // pred_check
        %p326 = pneg %p325
      $region46: #{tpu_custom_call.1} parent=5 // pred_check_branch
        %328 = sbr.rel (%p326) target = $region48
      $region47: #{tpu_custom_call.1} parent=5 // pred_region
        %s329 = ssub.s32 %s17, 2
        // Predicated region
        $region49: #{tpu_custom_call.1} parent=47 // pred_check
          %p330 = pneg %p114
        $region50: #{tpu_custom_call.1} parent=47 // pred_check_branch
          %332 = sbr.rel (%p330) target = $region52
        $region51: #{tpu_custom_call.1} parent=47 // pred_region
          %s333 = sand.u32 %s99, 1
          %s334 = scalar_lea.sflag [#allocation4], %s333
          %s335 = sand.u32 %s99, 1
          %s336 = smul.addr %s335, 2
          %s337 = scalar_lea.vmem [#allocation7], %s336
          %339 = dma.done %s334, 32
        $region52: #{tpu_custom_call.1} parent=47 // pred_fallthru
          _
      $region48: #{tpu_custom_call.1} parent=5 // pred_fallthru
        _
    $region6: #{tpu_custom_call.1} parent=1 // loop_footer
      %s21 = sadd.s32 1, %s17
    $region7: #{tpu_custom_call.1} parent=1 // loop_footer_branch
      %16 = sbr.rel target = $region3
    $region8: #{tpu_custom_call.1} parent=1 // loop_exit
      _
    %340 = vsyncpa [#allocation3], 1
    %s341 = scalar_lea.sflag [#allocation3], 1
    %342 = vsyncpa %s341, 1
    %343 = vsyncpa [#allocation6], 1
    %s344 = scalar_lea.sflag [#allocation6], 1
    %345 = vsyncpa %s344, 1
    %346 = vsyncpa [#allocation4], 1
    %s347 = scalar_lea.sflag [#allocation4], 1
    %348 = vsyncpa %s347, 1

</llo_original>
